<compile_context>
chip_gen: v6e
topology: v6e:2x2x1
jax: 0.10.0
libtpu: 0.0.40
codegen_flags: <defaults>
</compile_context>

<pallas_src>
import numpy as np
import jax
import jax.numpy as jnp
from jax.experimental import pallas as pl
from jax.experimental.pallas import tpu as pltpu

TEX_RES = 512            # FLAME texture space is 512x512x3 (hardcoded in forward)
_LANE = 128
_PAD_MULT = 16 * _LANE   # pad n_out so 4/8/16-step grids always tile lane-densely


def _round_up(x, m):
    return -(-x // m) * m


def _padded_vmem_bytes(rows, cols, itemsize):
    """VMEM bytes of one (rows, cols) buffer incl. (sublane, lane) layout padding."""
    sublane = 8 * (4 // itemsize)          # 8 for f32, 16 for bf16
    return _round_up(rows, sublane) * _round_up(cols, _LANE) * itemsize


# ----------------------------------------------------------------------------
# Kernel
# ----------------------------------------------------------------------------
def _flametex_kernel(code_ref, basis_ref, out_ref):
    # code_ref:  (B, K+1)      bf16 texcode with a trailing ones column
    # basis_ref: (K+1, TN)     bf16 tile; row K holds the texture mean
    # out_ref:   (B, TN)       f32 final flat output tile (scaled, clamped)
    t = jnp.dot(code_ref[...], basis_ref[...],
                preferred_element_type=jnp.float32)
    out_ref[...] = jnp.clip(t * (1.0 / 255.0), 0.0, 1.0)


# ----------------------------------------------------------------------------
# One-time parameter preparation (module "init" — NOT in the per-call path)
# ----------------------------------------------------------------------------
def prepare_flame_tex(texture_mean, texture_basis, tex_size):
    """Pre-decimate + pre-permute + fold-mean + bf16-compress the texture space.

    texture_mean:  (1, 1, N) float32   (mirrors the PyTorch buffer)
    texture_basis: (1, N, K) float32   (mirrors the PyTorch buffer)
    Returns basis_aug: (K+1, n_pad) bfloat16 whose first 3*tex_size^2 columns
    are ordered as the final (C_bgr, H, W) output; row K is the mean; padded
    columns are zero.
    """
    N, K = texture_basis.shape[1], texture_basis.shape[2]
    assert N == TEX_RES * TEX_RES * 3

    # torch F.interpolate(mode='nearest') source index: floor(dst * in/out)
    src = np.floor(np.arange(tex_size) * (TEX_RES / tex_size)).astype(np.int64)
    c_in = np.array([2, 1, 0])  # output channel c (BGR) reads input channel 2-c

    # Flat index into the original (H, W, C)-row-major texture vector, laid out
    # in final output order (C_bgr, H, W).
    cols = (src[None, :, None] * (TEX_RES * 3)
            + src[None, None, :] * 3
            + c_in[:, None, None])                          # (3, tex, tex)
    cols = jnp.asarray(cols.reshape(-1), dtype=jnp.int32)   # (n_out,)
    n_out = int(cols.shape[0])
    n_pad = _round_up(n_out, _PAD_MULT)

    basis_flat = texture_basis.reshape(N, K)
    mean_flat = texture_mean.reshape(N)
    basis_sel = jnp.take(basis_flat, cols, axis=0).T          # (K, n_out)
    mean_sel = jnp.take(mean_flat, cols, axis=0)[None, :]     # (1, n_out)
    aug = jnp.concatenate([basis_sel, mean_sel], axis=0)      # (K+1, n_out)
    aug = jnp.pad(aug, ((0, 0), (0, n_pad - n_out)))          # zero-pad columns
    return aug.astype(jnp.bfloat16)


def _pick_grid(n_pad, b, kp1, vmem_budget_bytes=12 << 20):
    """Fewest grid steps (preferring >=4 for v7x's two TensorCores) whose
    double-buffered, padding-aware VMEM footprint fits the budget."""
    code_bytes = 2 * _padded_vmem_bytes(b, kp1, 2)
    for steps in (4, 8, 16, 32, 64, 128, 256, 512, 1024):
        if n_pad % steps or (n_pad // steps) % _LANE:
            continue
        tile_n = n_pad // steps
        basis_bytes = 2 * _padded_vmem_bytes(kp1, tile_n, 2)
        out_bytes = 2 * _padded_vmem_bytes(b, tile_n, 4)
        if code_bytes + basis_bytes + out_bytes <= vmem_budget_bytes:
            return steps, tile_n
    # Narrowest lane-dense tile always fits (n_pad is a multiple of 128).
    return n_pad // _LANE, _LANE


# ----------------------------------------------------------------------------
# Forward
# ----------------------------------------------------------------------------
def flame_tex_forward(texcode, basis_aug, tex_size):
    """Pallas implementation of FlameTex.forward on prepared parameters.

    texcode:   (B, K) float32
    basis_aug: (K+1, n_pad) bfloat16 from prepare_flame_tex
    returns:   (B, 3, tex_size, tex_size) float32, NCHW, BGR, in [0, 1]
    """
    B, K = texcode.shape
    kp1, n_pad = basis_aug.shape
    assert kp1 == K + 1
    n_out = 3 * tex_size * tex_size
    assert n_pad >= n_out and n_pad % _LANE == 0

    # Append the ones column that selects the folded-in mean row.
    code_aug = jnp.concatenate(
        [texcode, jnp.ones((B, 1), texcode.dtype)], axis=1).astype(jnp.bfloat16)

    steps, tile_n = _pick_grid(n_pad, B, kp1)

    vmem_needed = (2 * _padded_vmem_bytes(B, kp1, 2)
                   + 2 * _padded_vmem_bytes(kp1, tile_n, 2)
                   + 2 * _padded_vmem_bytes(B, tile_n, 4))
    vmem_limit = min(max(int(vmem_needed * 3 // 2), 4 << 20), 48 << 20)

    cost = pl.CostEstimate(
        flops=2 * B * kp1 * n_pad,
        transcendentals=0,
        bytes_accessed=kp1 * n_pad * 2 + B * kp1 * 2 + B * n_pad * 4)

    tex_flat = pl.pallas_call(
        _flametex_kernel,
        out_shape=jax.ShapeDtypeStruct((B, n_pad), jnp.float32),
        grid_spec=pltpu.PrefetchScalarGridSpec(
            num_scalar_prefetch=0,
            grid=(steps,),
            in_specs=[
                pl.BlockSpec((B, kp1), lambda i: (0, 0)),
                pl.BlockSpec((kp1, tile_n), lambda i: (0, i)),
            ],
            out_specs=pl.BlockSpec((B, tile_n), lambda i: (0, i)),
        ),
        compiler_params=pltpu.CompilerParams(
            dimension_semantics=("parallel",),
            vmem_limit_bytes=vmem_limit),
        cost_estimate=cost,
    )(code_aug, basis_aug)

    # Kernel already produced final (C_bgr, H, W) ordering; drop pad + reshape.
    return tex_flat[:, :n_out].reshape(B, 3, tex_size, tex_size)


# ----------------------------------------------------------------------------
# Pure-JAX f32 reference (transcription of the PyTorch forward) for verification
# ----------------------------------------------------------------------------
def flame_tex_reference(texcode, texture_mean, texture_basis, tex_size):
    texture = texture_mean + (texture_basis * texcode[:, None, :]).sum(-1)
    B = texcode.shape[0]
    texture = texture.reshape(B, TEX_RES, TEX_RES, 3).transpose(0, 3, 1, 2)
    src = jnp.floor(jnp.arange(tex_size) * (TEX_RES / tex_size)).astype(jnp.int32)
    texture = texture[:, :, src, :][:, :, :, src]
    texture = texture[:, jnp.array([2, 1, 0]), :, :]
    texture = texture / 255.0
    return jnp.clip(texture, 0.0, 1.0)


if __name__ == "__main__":
    B, K = 2, 8          # batch, tex_params
    tex_size = 64        # small output resolution for the example
    N = TEX_RES * TEX_RES * 3

    key = jax.random.PRNGKey(0)
    k1, k2, k3 = jax.random.split(key, 3)
    # Deterministic synthetic "FLAME texture space" parameters.
    texture_mean = jax.random.uniform(k1, (1, 1, N), jnp.float32, 0.0, 255.0)
    texture_basis = jax.random.normal(k2, (1, N, K), jnp.float32) * 20.0
    texcode = jax.random.normal(k3, (B, K), jnp.float32)

    # One-time prep (init-time in a real model): decimate + permute + fold mean
    # + bf16 compress + pad to a lane/step-friendly width.
    basis_aug = jax.block_until_ready(
        prepare_flame_tex(texture_mean, texture_basis, tex_size))

    out = flame_tex_forward(texcode, basis_aug, tex_size)
    out = jax.block_until_ready(out)

    ref = flame_tex_reference(texcode, texture_mean, texture_basis, tex_size)
    assert out.shape == (B, 3, tex_size, tex_size), out.shape
    assert out.dtype == jnp.float32
    # bf16 basis/mean storage -> ~1e-3..1e-2 absolute error on the [0,1] texture.
    max_err = float(jnp.max(jnp.abs(out - ref)))
    assert max_err < 3e-2, f"max abs err {max_err}"
    print("KERNEL_OK")
</pallas_src>

<mosaic_0001>
module attributes {stable_mosaic.version = 11 : i64} {
  func.func @_flametex_kernel(%arg0: i32, %arg1: memref<2x9xbf16, #tpu.memory_space<vmem>>, %arg2: memref<9x3072xbf16, #tpu.memory_space<vmem>>, %arg3: memref<2x3072xf32, #tpu.memory_space<vmem>>) attributes {dimension_semantics = [#tpu.dimension_semantics<parallel>], iteration_bounds = array<i64: 4>, scalar_prefetch = 0 : i64, scratch_operands = 0 : i64, tpu.core_type = #tpu.core_type<tc>, window_params = [{pipeline_mode = #tpu.pipeline_mode<synchronous>, transform_indices = @transform_0, window_bounds = array<i64: 2, 9>}, {transform_indices = @transform_1, window_bounds = array<i64: 9, 3072>}, {transform_indices = @transform_2, window_bounds = array<i64: 2, 3072>}]} {
    %c0 = arith.constant 0 : index
    %c0_0 = arith.constant 0 : index
    %0 = vector.load %arg1[%c0, %c0_0] : memref<2x9xbf16, #tpu.memory_space<vmem>>, vector<2x9xbf16>
    %c0_1 = arith.constant 0 : index
    %c0_2 = arith.constant 0 : index
    %1 = vector.load %arg2[%c0_1, %c0_2] : memref<9x3072xbf16, #tpu.memory_space<vmem>>, vector<9x3072xbf16>
    %cst = arith.constant dense<0.000000e+00> : vector<2x3072xf32>
    %2 = tpu.matmul %0, %1, %cst {dimension_numbers = #tpu.dot_dimension_numbers<[1], [0], [0], [1], [0, 0, 1, 1], [], []>} : vector<2x9xbf16>, vector<9x3072xbf16>, vector<2x3072xf32> -> vector<2x3072xf32>
    %cst_3 = arith.constant 0.00392156886 : f32
    %3 = vector.broadcast %cst_3 : f32 to vector<2x3072xf32>
    %4 = arith.mulf %2, %3 : vector<2x3072xf32>
    %cst_4 = arith.constant 0.000000e+00 : f32
    %cst_5 = arith.constant 1.000000e+00 : f32
    %5 = vector.broadcast %cst_4 : f32 to vector<2x3072xf32>
    %6 = arith.maximumf %5, %4 : vector<2x3072xf32>
    %7 = vector.broadcast %cst_5 : f32 to vector<2x3072xf32>
    %8 = arith.minimumf %7, %6 : vector<2x3072xf32>
    %c0_6 = arith.constant 0 : index
    %c0_7 = arith.constant 0 : index
    %9 = vector.load %arg3[%c0_6, %c0_7] : memref<2x3072xf32, #tpu.memory_space<vmem>>, vector<2x3072xf32>
    tpu.vector_store %arg3[%c0_6, %c0_7], %8 {strides = array<i32>} : memref<2x3072xf32, #tpu.memory_space<vmem>>, vector<2x3072xf32>,
    return
  }
  func.func @transform_0(%arg0: i32) -> (i32, i32) {
    %c0_i32 = arith.constant 0 : i32
    %c0_i32_0 = arith.constant 0 : i32
    %c0_i32_1 = arith.constant 0 : i32
    return %c0_i32, %c0_i32_0 : i32, i32
  }
  func.func @transform_1(%arg0: i32) -> (i32, i32) {
    %c0_i32 = arith.constant 0 : i32
    %c0_i32_0 = arith.constant 0 : i32
    return %c0_i32, %arg0 : i32, i32
  }
  func.func @transform_2(%arg0: i32) -> (i32, i32) {
    %c0_i32 = arith.constant 0 : i32
    %c0_i32_0 = arith.constant 0 : i32
    return %c0_i32, %arg0 : i32, i32
  }
}

</mosaic_0001>

<llo_original>
// kernel: tpu_custom_call.1
$region0: #{tpu_custom_call.1}
  #allocation0 [shape = 'u32[]', space=smem, size = 0x4, offset = 0x4, fixed_abs, tag = 'smem constant byte address 0x4 - core index']
  #allocation1 [shape = 'u32[144,128]{1,0:T(1,128)}', space=vmem, size = 0x12000, scoped, tag = 'internal scratch']
  %s0 = inlined_call_operand.hbm [shape: bf16[2,9], index: 0, kind: input, shape index: {}]
  %s1 = inlined_call_operand.hbm [shape: bf16[9,12288], index: 1, kind: input, shape index: {}]
  %s2 = inlined_call_operand.hbm [shape: f32[2,12288], index: 2, kind: output, shape index: {}]
  %s3 = sld [smem:[#allocation0]]
  $region49: #{tpu_custom_call.1} parent=0
    _
  %s5 = ssub.s32 1, %s3
  %s6 = scalar_select 0, %s5, %s3
  $region1: #{tpu_custom_call.1} parent=0
    #allocation2 [shape = 'u8[512]{0}', space=vmem, size = 0x400, scoped, tag = 'input window, operand 0, single buffered']
    #allocation3 [shape = 's32[2]{0}', space=sflag, size = 0x8, scoped, tag = 'scoped memory for tpu_custom_call.1']
    #allocation4 [shape = 's32[2]{0}', space=sflag, size = 0x8, scoped, tag = 'scoped memory for tpu_custom_call.1']
    #allocation5 [shape = 'u8[196608]{0}', space=vmem, size = 0x30000, scoped, tag = 'input window, operand 1']
    #allocation6 [shape = 's32[2]{0}', space=sflag, size = 0x8, scoped, tag = 'scoped memory for tpu_custom_call.1']
    #allocation7 [shape = 'u8[49152]{0}', space=vmem, size = 0xc000, scoped, tag = 'output window, operand 0']
    %7 = vsyncpa [#allocation3], 0
    %8 = vsyncpa [#allocation6], 0
    %s9 = scalar_lea.sflag [#allocation6], 1
    %10 = vsyncpa %s9, 0
    %11 = vsyncpa [#allocation4], 0
    %s12 = scalar_lea.sflag [#allocation4], 1
    %13 = vsyncpa %s12, 0
    loop: start=0, step=1, limit=6
    $region2: #{tpu_custom_call.1} parent=1 // loop_pre_header
      _
    $region3: #{tpu_custom_call.1} parent=1 // loop_header
      %s15 = sphi 0, %s19
      %p16 = scmp.ge.s32.totalorder %s15, 6
      %s23 = sphi 0, %s23
      %s25 = sphi 0, %s23
      %s26 = sphi 0, %s25
      %s40 = sphi 0, %s26
      %s46 = sphi 0, %s48
      %s49 = sphi 0, %s46
      %s50 = sphi 0, %s49
      %s66 = sphi 0, %s50
      %s72 = sphi 0, %s74
      %s75 = sphi 0, %s72
      %s76 = sphi 0, %s75
      %s92 = sphi 0, %s76
    $region4: #{tpu_custom_call.1} parent=1 // loop_header_branch
      %18 = sbr.rel (%p16) target = $region8
    $region5: #{tpu_custom_call.1} parent=1 // loop_body
      %s20 = ssub.s32 %s15, 1
      %s21 = ssub.s32 %s15, 2
      %s22 = sadd.s32 %s15, 1
      %s24 = sadd.s32 %s23, 1
      %p27 = scmp.eq.s32.totalorder %s15, 3
      %p28 = scmp.ne.s32.totalorder %s23, %s25
      %p29 = scmp.eq.s32.totalorder %s15, 0
      %p30 = por %p28, %p29
      %p31 = scmp.ne.s32.totalorder %s23, %s25
      %p32 = scmp.eq.s32.totalorder %s20, 3
      %p33 = por %p31, %p32
      %p34 = scmp.ne.s32.totalorder %s25, %s26
      %p35 = scmp.eq.s32.totalorder %s20, 0
      %p36 = por %p34, %p35
      %p37 = scmp.ne.s32.totalorder %s25, %s26
      %p38 = scmp.eq.s32.totalorder %s21, 3
      %p39 = por %p37, %p38
      %p41 = scmp.ne.s32.totalorder %s26, %s40
      %p42 = scmp.eq.s32.totalorder %s21, 0
      %p43 = por %p41, %p42
      %s44 = ssub.s32 %s15, %s22
      %p45 = scmp.eq.s32.totalorder %s44, 0
      %s47 = sadd.s32 %s46, 1
      %s48 = scalar_select %p45, %s46, %s47
      %p51 = pneg %p45
      %p52 = scmp.eq.s32.totalorder %s15, 3
      %p53 = por %p51, %p52
      %p54 = scmp.ne.s32.totalorder %s46, %s49
      %p55 = scmp.eq.s32.totalorder %s15, 0
      %p56 = por %p54, %p55
      %p57 = scmp.ne.s32.totalorder %s46, %s49
      %p58 = scmp.eq.s32.totalorder %s20, 3
      %p59 = por %p57, %p58
      %p60 = scmp.ne.s32.totalorder %s49, %s50
      %p61 = scmp.eq.s32.totalorder %s20, 0
      %p62 = por %p60, %p61
      %p63 = scmp.ne.s32.totalorder %s49, %s50
      %p64 = scmp.eq.s32.totalorder %s21, 3
      %p65 = por %p63, %p64
      %p67 = scmp.ne.s32.totalorder %s50, %s66
      %p68 = scmp.eq.s32.totalorder %s21, 0
      %p69 = por %p67, %p68
      %s70 = ssub.s32 %s15, %s22
      %p71 = scmp.eq.s32.totalorder %s70, 0
      %s73 = sadd.s32 %s72, 1
      %s74 = scalar_select %p71, %s72, %s73
      %p77 = pneg %p71
      %p78 = scmp.eq.s32.totalorder %s15, 3
      %p79 = por %p77, %p78
      %p80 = scmp.ne.s32.totalorder %s72, %s75
      %p81 = scmp.eq.s32.totalorder %s15, 0
      %p82 = por %p80, %p81
      %p83 = scmp.ne.s32.totalorder %s72, %s75
      %p84 = scmp.eq.s32.totalorder %s20, 3
      %p85 = por %p83, %p84
      %p86 = scmp.ne.s32.totalorder %s75, %s76
      %p87 = scmp.eq.s32.totalorder %s20, 0
      %p88 = por %p86, %p87
      %p89 = scmp.ne.s32.totalorder %s75, %s76
      %p90 = scmp.eq.s32.totalorder %s21, 3
      %p91 = por %p89, %p90
      %p93 = scmp.ne.s32.totalorder %s76, %s92
      %p94 = scmp.eq.s32.totalorder %s21, 0
      %p95 = por %p93, %p94
      %p96 = scmp.le.s32.totalorder 1, %s15
      %p97 = scmp.lt.s32.totalorder %s15, 5
      %p98 = pnand %p96, %p97
      %p99 = pneg %p98
      // Predicated region
      $region9: #{tpu_custom_call.1} parent=5 // pred_check
        _
      $region10: #{tpu_custom_call.1} parent=5 // pred_check_branch
        %101 = sbr.rel (%p98) target = $region12
      $region11: #{tpu_custom_call.1} parent=5 // pred_region
        %s102 = ssub.s32 %s15, 1
        // Predicated region
        $region13: #{tpu_custom_call.1} parent=11 // pred_check
          %p103 = pneg %p36
        $region14: #{tpu_custom_call.1} parent=11 // pred_check_branch
          %105 = sbr.rel (%p103) target = $region16
        $region15: #{tpu_custom_call.1} parent=11 // pred_region
          %s107 = ssub.s32 16, 16
          %108 = vsyncadd [#allocation3], %s107
          %s110 = sshll.u32 [#allocation2], 4
          %s111 = int_to_ptr.vmem [resolvable:$true] %s110
          %113 = dma.hbm_to_vmem [thread:$0]  %s0, 16, %s111, [#allocation3]
        $region16: #{tpu_custom_call.1} parent=11 // pred_fallthru
          _
      $region12: #{tpu_custom_call.1} parent=5 // pred_fallthru
        _
      %p114 = scmp.lt.s32.totalorder %s15, 4
      // Predicated region
      $region17: #{tpu_custom_call.1} parent=5 // pred_check
        %p115 = pneg %p114
      $region18: #{tpu_custom_call.1} parent=5 // pred_check_branch
        %117 = sbr.rel (%p115) target = $region20
      $region19: #{tpu_custom_call.1} parent=5 // pred_region
        // Predicated region
        $region21: #{tpu_custom_call.1} parent=19 // pred_check
          %p118 = pneg %p56
        $region22: #{tpu_custom_call.1} parent=19 // pred_check_branch
          %120 = sbr.rel (%p118) target = $region24
        $region23: #{tpu_custom_call.1} parent=19 // pred_region
          %s121 = sand.u32 %s46, 1
          %s122 = scalar_lea.sflag [#allocation6], %s121
          %s123 = sand.u32 %s46, 1
          %s124 = smul.addr %s123, 192
          %s125 = scalar_lea.vmem [#allocation5], %s124
          %s126 = smul.u32 24, %s15
          %s128 = ssub.s32 3072, 3072
          %129 = vsyncadd %s122, %s128
          %s130 = smul.addr %s126, 64
          %s131 = scalar_lea.hbm %s1, %s130
          %s132 = sshll.u32 %s125, 4
          %s133 = int_to_ptr.vmem [resolvable:$true] %s132
          %138 = dma.hbm_to_vmem [thread:$0]  %s131, 3072, %s133, %s122, 6144, 1536, 96
        $region24: #{tpu_custom_call.1} parent=19 // pred_fallthru
          _
      $region20: #{tpu_custom_call.1} parent=5 // pred_fallthru
        _
      %p139 = scmp.le.s32.totalorder 1, %s15
      %p140 = scmp.lt.s32.totalorder %s15, 5
      %p141 = pnand %p139, %p140
      %p142 = pneg %p141
      // Predicated region
      $region25: #{tpu_custom_call.1} parent=5 // pred_check
        _
      $region26: #{tpu_custom_call.1} parent=5 // pred_check_branch
        %144 = sbr.rel (%p141) target = $region28
      $region27: #{tpu_custom_call.1} parent=5 // pred_region
        %s145 = ssub.s32 %s15, 1
        // Predicated region
        $region29: #{tpu_custom_call.1} parent=27 // pred_check
          %p146 = pneg %p36
        $region30: #{tpu_custom_call.1} parent=27 // pred_check_branch
          %148 = sbr.rel (%p146) target = $region32
        $region31: #{tpu_custom_call.1} parent=27 // pred_region
          %149 = dma.done [#allocation3], 16
        $region32: #{tpu_custom_call.1} parent=27 // pred_fallthru
          _
        %s150 = sand.u32 %s49, 1
        %s151 = scalar_lea.sflag [#allocation6], %s150
        %s152 = sand.u32 %s49, 1
        %s153 = smul.addr %s152, 192
        %s154 = scalar_lea.vmem [#allocation5], %s153
        // Predicated region
        $region33: #{tpu_custom_call.1} parent=27 // pred_check
          %p155 = pneg %p62
        $region34: #{tpu_custom_call.1} parent=27 // pred_check_branch
          %157 = sbr.rel (%p155) target = $region36
        $region35: #{tpu_custom_call.1} parent=27 // pred_region
          %158 = dma.done %s151, 3072
        $region36: #{tpu_custom_call.1} parent=27 // pred_fallthru
          _
        %p159 = pneg %p36
        %p160 = pneg %p33
        %s161 = sand.u32 %s49, 1
        %s162 = scalar_lea.sflag [#allocation6], %s161
        %s163 = sand.u32 %s49, 1
        %s164 = smul.addr %s163, 192
        %s165 = scalar_lea.vmem [#allocation5], %s164
        %p166 = pneg %p62
        %p167 = pneg %p59
        %p168 = pneg %p88
        %p169 = pneg %p85
        %s170 = sand.u32 %s75, 1
        %s171 = scalar_lea.sflag [#allocation4], %s170
        %s172 = sand.u32 %s75, 1
        %s173 = smul.addr %s172, 48
        %s174 = scalar_lea.vmem [#allocation7], %s173
        %s175 = smul.u32 24, %s20
        %s176 = smul.u32 24, %s20
        %v178 = vld [vmem:[#allocation2] sm:$0x1]
        %v179 = vld [vmem:[%s154] sm:$0xff]
        %v180 = vld [vmem:[%s154 + $0x8] sm:$0xff]
        %v181 = vld [vmem:[%s154 + $0x10] sm:$0xff]
        %v182 = vld [vmem:[%s154 + $0x18] sm:$0xff]
        %v183 = vld [vmem:[%s154 + $0x20] sm:$0xff]
        %v184 = vld [vmem:[%s154 + $0x28] sm:$0xff]
        %v185 = vld [vmem:[%s154 + $0x30] sm:$0xff]
        %v186 = vld [vmem:[%s154 + $0x38] sm:$0xff]
        %v187 = vld [vmem:[%s154 + $0x40] sm:$0xff]
        %v188 = vld [vmem:[%s154 + $0x48] sm:$0xff]
        %v189 = vld [vmem:[%s154 + $0x50] sm:$0xff]
        %v190 = vld [vmem:[%s154 + $0x58] sm:$0xff]
        %v191 = vld [vmem:[%s154 + $0x60] sm:$0x11]
        %v192 = vld [vmem:[%s154 + $0x68] sm:$0x11]
        %v193 = vld [vmem:[%s154 + $0x70] sm:$0x11]
        %v194 = vld [vmem:[%s154 + $0x78] sm:$0x11]
        %v195 = vld [vmem:[%s154 + $0x80] sm:$0x11]
        %v196 = vld [vmem:[%s154 + $0x88] sm:$0x11]
        %v197 = vld [vmem:[%s154 + $0x90] sm:$0x11]
        %v198 = vld [vmem:[%s154 + $0x98] sm:$0x11]
        %v199 = vld [vmem:[%s154 + $0xa0] sm:$0x11]
        %v200 = vld [vmem:[%s154 + $0xa8] sm:$0x11]
        %v201 = vld [vmem:[%s154 + $0xb0] sm:$0x11]
        %v202 = vld [vmem:[%s154 + $0xb8] sm:$0x11]
        %v227 = vunpack.c.l.b16 %v179
        %v228 = vunpack.c.h.b16 %v179
        %v229 = vunpack.c.l.b16 %v180
        %v230 = vunpack.c.h.b16 %v180
        %v231 = vunpack.c.l.b16 %v181
        %v232 = vunpack.c.h.b16 %v181
        %v233 = vunpack.c.l.b16 %v182
        %v234 = vunpack.c.h.b16 %v182
        %v235 = vunpack.c.l.b16 %v183
        %v236 = vunpack.c.h.b16 %v183
        %v237 = vunpack.c.l.b16 %v184
        %v238 = vunpack.c.h.b16 %v184
        %v239 = vunpack.c.l.b16 %v185
        %v240 = vunpack.c.h.b16 %v185
        %v241 = vunpack.c.l.b16 %v186
        %v242 = vunpack.c.h.b16 %v186
        %v243 = vunpack.c.l.b16 %v187
        %v244 = vunpack.c.h.b16 %v187
        %v245 = vunpack.c.l.b16 %v188
        %v246 = vunpack.c.h.b16 %v188
        %v247 = vunpack.c.l.b16 %v189
        %v248 = vunpack.c.h.b16 %v189
        %v249 = vunpack.c.l.b16 %v190
        %v250 = vunpack.c.h.b16 %v190
        %v251 = vunpack.c.l.b16 %v191
        %v252 = vunpack.c.h.b16 %v191
        %v253 = vunpack.c.l.b16 %v192
        %v254 = vunpack.c.h.b16 %v192
        %v255 = vunpack.c.l.b16 %v193
        %v256 = vunpack.c.h.b16 %v193
        %v257 = vunpack.c.l.b16 %v194
        %v258 = vunpack.c.h.b16 %v194
        %v259 = vunpack.c.l.b16 %v195
        %v260 = vunpack.c.h.b16 %v195
        %v261 = vunpack.c.l.b16 %v196
        %v262 = vunpack.c.h.b16 %v196
        %v263 = vunpack.c.l.b16 %v197
        %v264 = vunpack.c.h.b16 %v197
        %v265 = vunpack.c.l.b16 %v198
        %v266 = vunpack.c.h.b16 %v198
        %v267 = vunpack.c.l.b16 %v199
        %v268 = vunpack.c.h.b16 %v199
        %v269 = vunpack.c.l.b16 %v200
        %v270 = vunpack.c.h.b16 %v200
        %v271 = vunpack.c.l.b16 %v201
        %v272 = vunpack.c.h.b16 %v201
        %v273 = vunpack.c.l.b16 %v202
        %v274 = vunpack.c.h.b16 %v202
        %v275 = vpack.c.b16 %v251, %v227
        %v276 = vpack.c.b16 %v252, %v228
        %v277 = vpack.c.b16 %v253, %v229
        %v278 = vpack.c.b16 %v254, %v230
        %v279 = vpack.c.b16 %v255, %v231
        %v280 = vpack.c.b16 %v256, %v232
        %v281 = vpack.c.b16 %v257, %v233
        %v282 = vpack.c.b16 %v258, %v234
        %v283 = vpack.c.b16 %v259, %v235
        %v284 = vpack.c.b16 %v260, %v236
        %v285 = vpack.c.b16 %v261, %v237
        %v286 = vpack.c.b16 %v262, %v238
        %v287 = vpack.c.b16 %v263, %v239
        %v288 = vpack.c.b16 %v264, %v240
        %v289 = vpack.c.b16 %v265, %v241
        %v290 = vpack.c.b16 %v266, %v242
        %v291 = vpack.c.b16 %v267, %v243
        %v292 = vpack.c.b16 %v268, %v244
        %v293 = vpack.c.b16 %v269, %v245
        %v294 = vpack.c.b16 %v270, %v246
        %v295 = vpack.c.b16 %v271, %v247
        %v296 = vpack.c.b16 %v272, %v248
        %v297 = vpack.c.b16 %v273, %v249
        %v298 = vpack.c.b16 %v274, %v250
        %vm299 = vcmask 72704
        %v301 = vsel %vm299, %v178, 0
        %vm303 = vcmask 1043456
        %vm304 = vcmask 1044480
        %v305 = vsel %vm303, 4294967295, 65535
        %v306 = vsel %vm304, %v305, 0
        %v308 = vand.u32 %v275, %v306
        %v311 = vand.u32 %v276, %v306
        %v314 = vand.u32 %v277, %v306
        %v317 = vand.u32 %v278, %v306
        %v320 = vand.u32 %v279, %v306
        %v323 = vand.u32 %v280, %v306
        %v326 = vand.u32 %v281, %v306
        %v329 = vand.u32 %v282, %v306
        %v332 = vand.u32 %v283, %v306
        %v335 = vand.u32 %v284, %v306
        %v338 = vand.u32 %v285, %v306
        %v341 = vand.u32 %v286, %v306
        %v344 = vand.u32 %v287, %v306
        %v347 = vand.u32 %v288, %v306
        %v350 = vand.u32 %v289, %v306
        %v353 = vand.u32 %v290, %v306
        %v356 = vand.u32 %v291, %v306
        %v359 = vand.u32 %v292, %v306
        %v362 = vand.u32 %v293, %v306
        %v365 = vand.u32 %v294, %v306
        %v368 = vand.u32 %v295, %v306
        %v371 = vand.u32 %v296, %v306
        %v374 = vand.u32 %v297, %v306
        %v377 = vand.u32 %v298, %v306
        %379 = vmatprep.subr.bf16.mxu0 0
        %380 = vmatpush1.bf16.msra.mxu0 0
        %381 = vmatprep.subr.bf16.mxu0 0
        %382 = vmatpush1.bf16.msra.mxu0 0
        %383 = vmatprep.subr.bf16.mxu0 0
        %384 = vmatpush1.bf16.msra.mxu0 0
        %385 = vmatprep.subr.bf16.mxu0 0
        %386 = vmatpush1.bf16.msra.mxu0 0
        %387 = vmatprep.subr.bf16.mxu0 0
        %388 = vmatpush1.bf16.msra.mxu0 0
        %389 = vmatprep.subr.bf16.mxu0 0
        %390 = vmatpush1.bf16.msra.mxu0 0
        %391 = vmatprep.subr.bf16.mxu0 0
        %392 = vmatpush1.bf16.msra.mxu0 0
        %393 = vmatprep.subr.bf16.mxu0 %v311
        %394 = vmatpush1.bf16.msra.mxu0 %v308
        %395 = vmatprep.subr.bf16.mxu0 0
        %396 = vmatpush2.bf16.msra.mxu0 0
        %397 = vmatprep.subr.bf16.mxu0 0
        %398 = vmatpush2.bf16.msra.mxu0 0
        %399 = vmatprep.subr.bf16.mxu0 0
        %400 = vmatpush2.bf16.msra.mxu0 0
        %401 = vmatprep.subr.bf16.mxu0 0
        %402 = vmatpush2.bf16.msra.mxu0 0
        %403 = vmatprep.subr.bf16.mxu0 0
        %404 = vmatpush2.bf16.msra.mxu0 0
        %405 = vmatprep.subr.bf16.mxu0 0
        %406 = vmatpush2.bf16.msra.mxu0 0
        %407 = vmatprep.subr.bf16.mxu0 0
        %408 = vmatpush2.bf16.msra.mxu0 0
        %409 = vmatprep.subr.bf16.mxu0 0
        %410 = vmatpush2.bf16.msra.mxu0 0
        %411 = vmatprep.mubr.bf16.mxu0 0
        %412 = vmatmul.mubr.bf16.gmra.mxu0 %v301
        %v413 = vpop.f32.mrf.mxu0
        %v414 = vadd.f32 0.0, %v413
        %v415 = vpop.f32.mrf.mxu0
        %v416 = vadd.f32 0.0, %v415
        %v417 = vpop.f32.mrf.mxu0
        %v418 = vpop.f32.mrf.mxu0
        %419 = vdwg.mxu0
        %420 = vmatprep.subr.bf16.mxu0 0
        %421 = vmatpush1.bf16.msra.mxu0 0
        %422 = vmatprep.subr.bf16.mxu0 0
        %423 = vmatpush1.bf16.msra.mxu0 0
        %424 = vmatprep.subr.bf16.mxu0 0
        %425 = vmatpush1.bf16.msra.mxu0 0
        %426 = vmatprep.subr.bf16.mxu0 0
        %427 = vmatpush1.bf16.msra.mxu0 0
        %428 = vmatprep.subr.bf16.mxu0 0
        %429 = vmatpush1.bf16.msra.mxu0 0
        %430 = vmatprep.subr.bf16.mxu0 0
        %431 = vmatpush1.bf16.msra.mxu0 0
        %432 = vmatprep.subr.bf16.mxu0 0
        %433 = vmatpush1.bf16.msra.mxu0 0
        %434 = vmatprep.subr.bf16.mxu0 %v317
        %435 = vmatpush1.bf16.msra.mxu0 %v314
        %436 = vmatprep.subr.bf16.mxu0 0
        %437 = vmatpush2.bf16.msra.mxu0 0
        %438 = vmatprep.subr.bf16.mxu0 0
        %439 = vmatpush2.bf16.msra.mxu0 0
        %440 = vmatprep.subr.bf16.mxu0 0
        %441 = vmatpush2.bf16.msra.mxu0 0
        %442 = vmatprep.subr.bf16.mxu0 0
        %443 = vmatpush2.bf16.msra.mxu0 0
        %444 = vmatprep.subr.bf16.mxu0 0
        %445 = vmatpush2.bf16.msra.mxu0 0
        %446 = vmatprep.subr.bf16.mxu0 0
        %447 = vmatpush2.bf16.msra.mxu0 0
        %448 = vmatprep.subr.bf16.mxu0 0
        %449 = vmatpush2.bf16.msra.mxu0 0
        %450 = vmatprep.subr.bf16.mxu0 0
        %451 = vmatpush2.bf16.msra.mxu0 0
        %452 = vmatprep.mubr.bf16.mxu0 0
        %453 = vmatmul.mubr.bf16.gmra.mxu0 %v301
        %v454 = vpop.f32.mrf.mxu0
        %v455 = vadd.f32 0.0, %v454
        %v456 = vpop.f32.mrf.mxu0
        %v457 = vadd.f32 0.0, %v456
        %v458 = vpop.f32.mrf.mxu0
        %v459 = vpop.f32.mrf.mxu0
        %460 = vdwg.mxu0
        %461 = vmatprep.subr.bf16.mxu0 0
        %462 = vmatpush1.bf16.msra.mxu0 0
        %463 = vmatprep.subr.bf16.mxu0 0
        %464 = vmatpush1.bf16.msra.mxu0 0
        %465 = vmatprep.subr.bf16.mxu0 0
        %466 = vmatpush1.bf16.msra.mxu0 0
        %467 = vmatprep.subr.bf16.mxu0 0
        %468 = vmatpush1.bf16.msra.mxu0 0
        %469 = vmatprep.subr.bf16.mxu0 0
        %470 = vmatpush1.bf16.msra.mxu0 0
        %471 = vmatprep.subr.bf16.mxu0 0
        %472 = vmatpush1.bf16.msra.mxu0 0
        %473 = vmatprep.subr.bf16.mxu0 0
        %474 = vmatpush1.bf16.msra.mxu0 0
        %475 = vmatprep.subr.bf16.mxu0 %v323
        %476 = vmatpush1.bf16.msra.mxu0 %v320
        %477 = vmatprep.subr.bf16.mxu0 0
        %478 = vmatpush2.bf16.msra.mxu0 0
        %479 = vmatprep.subr.bf16.mxu0 0
        %480 = vmatpush2.bf16.msra.mxu0 0
        %481 = vmatprep.subr.bf16.mxu0 0
        %482 = vmatpush2.bf16.msra.mxu0 0
        %483 = vmatprep.subr.bf16.mxu0 0
        %484 = vmatpush2.bf16.msra.mxu0 0
        %485 = vmatprep.subr.bf16.mxu0 0
        %486 = vmatpush2.bf16.msra.mxu0 0
        %487 = vmatprep.subr.bf16.mxu0 0
        %488 = vmatpush2.bf16.msra.mxu0 0
        %489 = vmatprep.subr.bf16.mxu0 0
        %490 = vmatpush2.bf16.msra.mxu0 0
        %491 = vmatprep.subr.bf16.mxu0 0
        %492 = vmatpush2.bf16.msra.mxu0 0
        %493 = vmatprep.mubr.bf16.mxu0 0
        %494 = vmatmul.mubr.bf16.gmra.mxu0 %v301
        %v495 = vpop.f32.mrf.mxu0
        %v496 = vadd.f32 0.0, %v495
        %v497 = vpop.f32.mrf.mxu0
        %v498 = vadd.f32 0.0, %v497
        %v499 = vpop.f32.mrf.mxu0
        %v500 = vpop.f32.mrf.mxu0
        %501 = vdwg.mxu0
        %502 = vmatprep.subr.bf16.mxu0 0
        %503 = vmatpush1.bf16.msra.mxu0 0
        %504 = vmatprep.subr.bf16.mxu0 0
        %505 = vmatpush1.bf16.msra.mxu0 0
        %506 = vmatprep.subr.bf16.mxu0 0
        %507 = vmatpush1.bf16.msra.mxu0 0
        %508 = vmatprep.subr.bf16.mxu0 0
        %509 = vmatpush1.bf16.msra.mxu0 0
        %510 = vmatprep.subr.bf16.mxu0 0
        %511 = vmatpush1.bf16.msra.mxu0 0
        %512 = vmatprep.subr.bf16.mxu0 0
        %513 = vmatpush1.bf16.msra.mxu0 0
        %514 = vmatprep.subr.bf16.mxu0 0
        %515 = vmatpush1.bf16.msra.mxu0 0
        %516 = vmatprep.subr.bf16.mxu0 %v329
        %517 = vmatpush1.bf16.msra.mxu0 %v326
        %518 = vmatprep.subr.bf16.mxu0 0
        %519 = vmatpush2.bf16.msra.mxu0 0
        %520 = vmatprep.subr.bf16.mxu0 0
        %521 = vmatpush2.bf16.msra.mxu0 0
        %522 = vmatprep.subr.bf16.mxu0 0
        %523 = vmatpush2.bf16.msra.mxu0 0
        %524 = vmatprep.subr.bf16.mxu0 0
        %525 = vmatpush2.bf16.msra.mxu0 0
        %526 = vmatprep.subr.bf16.mxu0 0
        %527 = vmatpush2.bf16.msra.mxu0 0
        %528 = vmatprep.subr.bf16.mxu0 0
        %529 = vmatpush2.bf16.msra.mxu0 0
        %530 = vmatprep.subr.bf16.mxu0 0
        %531 = vmatpush2.bf16.msra.mxu0 0
        %532 = vmatprep.subr.bf16.mxu0 0
        %533 = vmatpush2.bf16.msra.mxu0 0
        %534 = vmatprep.mubr.bf16.mxu0 0
        %535 = vmatmul.mubr.bf16.gmra.mxu0 %v301
        %v536 = vpop.f32.mrf.mxu0
        %v537 = vadd.f32 0.0, %v536
        %v538 = vpop.f32.mrf.mxu0
        %v539 = vadd.f32 0.0, %v538
        %v540 = vpop.f32.mrf.mxu0
        %v541 = vpop.f32.mrf.mxu0
        %542 = vdwg.mxu0
        %543 = vmatprep.subr.bf16.mxu0 0
        %544 = vmatpush1.bf16.msra.mxu0 0
        %545 = vmatprep.subr.bf16.mxu0 0
        %546 = vmatpush1.bf16.msra.mxu0 0
        %547 = vmatprep.subr.bf16.mxu0 0
        %548 = vmatpush1.bf16.msra.mxu0 0
        %549 = vmatprep.subr.bf16.mxu0 0
        %550 = vmatpush1.bf16.msra.mxu0 0
        %551 = vmatprep.subr.bf16.mxu0 0
        %552 = vmatpush1.bf16.msra.mxu0 0
        %553 = vmatprep.subr.bf16.mxu0 0
        %554 = vmatpush1.bf16.msra.mxu0 0
        %555 = vmatprep.subr.bf16.mxu0 0
        %556 = vmatpush1.bf16.msra.mxu0 0
        %557 = vmatprep.subr.bf16.mxu0 %v335
        %558 = vmatpush1.bf16.msra.mxu0 %v332
        %559 = vmatprep.subr.bf16.mxu0 0
        %560 = vmatpush2.bf16.msra.mxu0 0
        %561 = vmatprep.subr.bf16.mxu0 0
        %562 = vmatpush2.bf16.msra.mxu0 0
        %563 = vmatprep.subr.bf16.mxu0 0
        %564 = vmatpush2.bf16.msra.mxu0 0
        %565 = vmatprep.subr.bf16.mxu0 0
        %566 = vmatpush2.bf16.msra.mxu0 0
        %567 = vmatprep.subr.bf16.mxu0 0
        %568 = vmatpush2.bf16.msra.mxu0 0
        %569 = vmatprep.subr.bf16.mxu0 0
        %570 = vmatpush2.bf16.msra.mxu0 0
        %571 = vmatprep.subr.bf16.mxu0 0
        %572 = vmatpush2.bf16.msra.mxu0 0
        %573 = vmatprep.subr.bf16.mxu0 0
        %574 = vmatpush2.bf16.msra.mxu0 0
        %575 = vmatprep.mubr.bf16.mxu0 0
        %576 = vmatmul.mubr.bf16.gmra.mxu0 %v301
        %v577 = vpop.f32.mrf.mxu0
        %v578 = vadd.f32 0.0, %v577
        %v579 = vpop.f32.mrf.mxu0
        %v580 = vadd.f32 0.0, %v579
        %v581 = vpop.f32.mrf.mxu0
        %v582 = vpop.f32.mrf.mxu0
        %583 = vdwg.mxu0
        %584 = vmatprep.subr.bf16.mxu0 0
        %585 = vmatpush1.bf16.msra.mxu0 0
        %586 = vmatprep.subr.bf16.mxu0 0
        %587 = vmatpush1.bf16.msra.mxu0 0
        %588 = vmatprep.subr.bf16.mxu0 0
        %589 = vmatpush1.bf16.msra.mxu0 0
        %590 = vmatprep.subr.bf16.mxu0 0
        %591 = vmatpush1.bf16.msra.mxu0 0
        %592 = vmatprep.subr.bf16.mxu0 0
        %593 = vmatpush1.bf16.msra.mxu0 0
        %594 = vmatprep.subr.bf16.mxu0 0
        %595 = vmatpush1.bf16.msra.mxu0 0
        %596 = vmatprep.subr.bf16.mxu0 0
        %597 = vmatpush1.bf16.msra.mxu0 0
        %598 = vmatprep.subr.bf16.mxu0 %v341
        %599 = vmatpush1.bf16.msra.mxu0 %v338
        %600 = vmatprep.subr.bf16.mxu0 0
        %601 = vmatpush2.bf16.msra.mxu0 0
        %602 = vmatprep.subr.bf16.mxu0 0
        %603 = vmatpush2.bf16.msra.mxu0 0
        %604 = vmatprep.subr.bf16.mxu0 0
        %605 = vmatpush2.bf16.msra.mxu0 0
        %606 = vmatprep.subr.bf16.mxu0 0
        %607 = vmatpush2.bf16.msra.mxu0 0
        %608 = vmatprep.subr.bf16.mxu0 0
        %609 = vmatpush2.bf16.msra.mxu0 0
        %610 = vmatprep.subr.bf16.mxu0 0
        %611 = vmatpush2.bf16.msra.mxu0 0
        %612 = vmatprep.subr.bf16.mxu0 0
        %613 = vmatpush2.bf16.msra.mxu0 0
        %614 = vmatprep.subr.bf16.mxu0 0
        %615 = vmatpush2.bf16.msra.mxu0 0
        %616 = vmatprep.mubr.bf16.mxu0 0
        %617 = vmatmul.mubr.bf16.gmra.mxu0 %v301
        %v618 = vpop.f32.mrf.mxu0
        %v619 = vadd.f32 0.0, %v618
        %v620 = vpop.f32.mrf.mxu0
        %v621 = vadd.f32 0.0, %v620
        %v622 = vpop.f32.mrf.mxu0
        %v623 = vpop.f32.mrf.mxu0
        %624 = vdwg.mxu0
        %625 = vmatprep.subr.bf16.mxu0 0
        %626 = vmatpush1.bf16.msra.mxu0 0
        %627 = vmatprep.subr.bf16.mxu0 0
        %628 = vmatpush1.bf16.msra.mxu0 0
        %629 = vmatprep.subr.bf16.mxu0 0
        %630 = vmatpush1.bf16.msra.mxu0 0
        %631 = vmatprep.subr.bf16.mxu0 0
        %632 = vmatpush1.bf16.msra.mxu0 0
        %633 = vmatprep.subr.bf16.mxu0 0
        %634 = vmatpush1.bf16.msra.mxu0 0
        %635 = vmatprep.subr.bf16.mxu0 0
        %636 = vmatpush1.bf16.msra.mxu0 0
        %637 = vmatprep.subr.bf16.mxu0 0
        %638 = vmatpush1.bf16.msra.mxu0 0
        %639 = vmatprep.subr.bf16.mxu0 %v347
        %640 = vmatpush1.bf16.msra.mxu0 %v344
        %641 = vmatprep.subr.bf16.mxu0 0
        %642 = vmatpush2.bf16.msra.mxu0 0
        %643 = vmatprep.subr.bf16.mxu0 0
        %644 = vmatpush2.bf16.msra.mxu0 0
        %645 = vmatprep.subr.bf16.mxu0 0
        %646 = vmatpush2.bf16.msra.mxu0 0
        %647 = vmatprep.subr.bf16.mxu0 0
        %648 = vmatpush2.bf16.msra.mxu0 0
        %649 = vmatprep.subr.bf16.mxu0 0
        %650 = vmatpush2.bf16.msra.mxu0 0
        %651 = vmatprep.subr.bf16.mxu0 0
        %652 = vmatpush2.bf16.msra.mxu0 0
        %653 = vmatprep.subr.bf16.mxu0 0
        %654 = vmatpush2.bf16.msra.mxu0 0
        %655 = vmatprep.subr.bf16.mxu0 0
        %656 = vmatpush2.bf16.msra.mxu0 0
        %657 = vmatprep.mubr.bf16.mxu0 0
        %658 = vmatmul.mubr.bf16.gmra.mxu0 %v301
        %v659 = vpop.f32.mrf.mxu0
        %v660 = vadd.f32 0.0, %v659
        %v661 = vpop.f32.mrf.mxu0
        %v662 = vadd.f32 0.0, %v661
        %v663 = vpop.f32.mrf.mxu0
        %v664 = vpop.f32.mrf.mxu0
        %665 = vdwg.mxu0
        %666 = vmatprep.subr.bf16.mxu0 0
        %667 = vmatpush1.bf16.msra.mxu0 0
        %668 = vmatprep.subr.bf16.mxu0 0
        %669 = vmatpush1.bf16.msra.mxu0 0
        %670 = vmatprep.subr.bf16.mxu0 0
        %671 = vmatpush1.bf16.msra.mxu0 0
        %672 = vmatprep.subr.bf16.mxu0 0
        %673 = vmatpush1.bf16.msra.mxu0 0
        %674 = vmatprep.subr.bf16.mxu0 0
        %675 = vmatpush1.bf16.msra.mxu0 0
        %676 = vmatprep.subr.bf16.mxu0 0
        %677 = vmatpush1.bf16.msra.mxu0 0
        %678 = vmatprep.subr.bf16.mxu0 0
        %679 = vmatpush1.bf16.msra.mxu0 0
        %680 = vmatprep.subr.bf16.mxu0 %v353
        %681 = vmatpush1.bf16.msra.mxu0 %v350
        %682 = vmatprep.subr.bf16.mxu0 0
        %683 = vmatpush2.bf16.msra.mxu0 0
        %684 = vmatprep.subr.bf16.mxu0 0
        %685 = vmatpush2.bf16.msra.mxu0 0
        %686 = vmatprep.subr.bf16.mxu0 0
        %687 = vmatpush2.bf16.msra.mxu0 0
        %688 = vmatprep.subr.bf16.mxu0 0
        %689 = vmatpush2.bf16.msra.mxu0 0
        %690 = vmatprep.subr.bf16.mxu0 0
        %691 = vmatpush2.bf16.msra.mxu0 0
        %692 = vmatprep.subr.bf16.mxu0 0
        %693 = vmatpush2.bf16.msra.mxu0 0
        %694 = vmatprep.subr.bf16.mxu0 0
        %695 = vmatpush2.bf16.msra.mxu0 0
        %696 = vmatprep.subr.bf16.mxu0 0
        %697 = vmatpush2.bf16.msra.mxu0 0
        %698 = vmatprep.mubr.bf16.mxu0 0
        %699 = vmatmul.mubr.bf16.gmra.mxu0 %v301
        %v700 = vpop.f32.mrf.mxu0
        %v701 = vadd.f32 0.0, %v700
        %v702 = vpop.f32.mrf.mxu0
        %v703 = vadd.f32 0.0, %v702
        %v704 = vpop.f32.mrf.mxu0
        %v705 = vpop.f32.mrf.mxu0
        %706 = vdwg.mxu0
        %707 = vmatprep.subr.bf16.mxu0 0
        %708 = vmatpush1.bf16.msra.mxu0 0
        %709 = vmatprep.subr.bf16.mxu0 0
        %710 = vmatpush1.bf16.msra.mxu0 0
        %711 = vmatprep.subr.bf16.mxu0 0
        %712 = vmatpush1.bf16.msra.mxu0 0
        %713 = vmatprep.subr.bf16.mxu0 0
        %714 = vmatpush1.bf16.msra.mxu0 0
        %715 = vmatprep.subr.bf16.mxu0 0
        %716 = vmatpush1.bf16.msra.mxu0 0
        %717 = vmatprep.subr.bf16.mxu0 0
        %718 = vmatpush1.bf16.msra.mxu0 0
        %719 = vmatprep.subr.bf16.mxu0 0
        %720 = vmatpush1.bf16.msra.mxu0 0
        %721 = vmatprep.subr.bf16.mxu0 %v359
        %722 = vmatpush1.bf16.msra.mxu0 %v356
        %723 = vmatprep.subr.bf16.mxu0 0
        %724 = vmatpush2.bf16.msra.mxu0 0
        %725 = vmatprep.subr.bf16.mxu0 0
        %726 = vmatpush2.bf16.msra.mxu0 0
        %727 = vmatprep.subr.bf16.mxu0 0
        %728 = vmatpush2.bf16.msra.mxu0 0
        %729 = vmatprep.subr.bf16.mxu0 0
        %730 = vmatpush2.bf16.msra.mxu0 0
        %731 = vmatprep.subr.bf16.mxu0 0
        %732 = vmatpush2.bf16.msra.mxu0 0
        %733 = vmatprep.subr.bf16.mxu0 0
        %734 = vmatpush2.bf16.msra.mxu0 0
        %735 = vmatprep.subr.bf16.mxu0 0
        %736 = vmatpush2.bf16.msra.mxu0 0
        %737 = vmatprep.subr.bf16.mxu0 0
        %738 = vmatpush2.bf16.msra.mxu0 0
        %739 = vmatprep.mubr.bf16.mxu0 0
        %740 = vmatmul.mubr.bf16.gmra.mxu0 %v301
        %v741 = vpop.f32.mrf.mxu0
        %v742 = vadd.f32 0.0, %v741
        %v743 = vpop.f32.mrf.mxu0
        %v744 = vadd.f32 0.0, %v743
        %v745 = vpop.f32.mrf.mxu0
        %v746 = vpop.f32.mrf.mxu0
        %747 = vdwg.mxu0
        %748 = vmatprep.subr.bf16.mxu0 0
        %749 = vmatpush1.bf16.msra.mxu0 0
        %750 = vmatprep.subr.bf16.mxu0 0
        %751 = vmatpush1.bf16.msra.mxu0 0
        %752 = vmatprep.subr.bf16.mxu0 0
        %753 = vmatpush1.bf16.msra.mxu0 0
        %754 = vmatprep.subr.bf16.mxu0 0
        %755 = vmatpush1.bf16.msra.mxu0 0
        %756 = vmatprep.subr.bf16.mxu0 0
        %757 = vmatpush1.bf16.msra.mxu0 0
        %758 = vmatprep.subr.bf16.mxu0 0
        %759 = vmatpush1.bf16.msra.mxu0 0
        %760 = vmatprep.subr.bf16.mxu0 0
        %761 = vmatpush1.bf16.msra.mxu0 0
        %762 = vmatprep.subr.bf16.mxu0 %v365
        %763 = vmatpush1.bf16.msra.mxu0 %v362
        %764 = vmatprep.subr.bf16.mxu0 0
        %765 = vmatpush2.bf16.msra.mxu0 0
        %766 = vmatprep.subr.bf16.mxu0 0
        %767 = vmatpush2.bf16.msra.mxu0 0
        %768 = vmatprep.subr.bf16.mxu0 0
        %769 = vmatpush2.bf16.msra.mxu0 0
        %770 = vmatprep.subr.bf16.mxu0 0
        %771 = vmatpush2.bf16.msra.mxu0 0
        %772 = vmatprep.subr.bf16.mxu0 0
        %773 = vmatpush2.bf16.msra.mxu0 0
        %774 = vmatprep.subr.bf16.mxu0 0
        %775 = vmatpush2.bf16.msra.mxu0 0
        %776 = vmatprep.subr.bf16.mxu0 0
        %777 = vmatpush2.bf16.msra.mxu0 0
        %778 = vmatprep.subr.bf16.mxu0 0
        %779 = vmatpush2.bf16.msra.mxu0 0
        %780 = vmatprep.mubr.bf16.mxu0 0
        %781 = vmatmul.mubr.bf16.gmra.mxu0 %v301
        %v782 = vpop.f32.mrf.mxu0
        %v783 = vadd.f32 0.0, %v782
        %v784 = vpop.f32.mrf.mxu0
        %v785 = vadd.f32 0.0, %v784
        %v786 = vpop.f32.mrf.mxu0
        %v787 = vpop.f32.mrf.mxu0
        %788 = vdwg.mxu0
        %789 = vmatprep.subr.bf16.mxu0 0
        %790 = vmatpush1.bf16.msra.mxu0 0
        %791 = vmatprep.subr.bf16.mxu0 0
        %792 = vmatpush1.bf16.msra.mxu0 0
        %793 = vmatprep.subr.bf16.mxu0 0
        %794 = vmatpush1.bf16.msra.mxu0 0
        %795 = vmatprep.subr.bf16.mxu0 0
        %796 = vmatpush1.bf16.msra.mxu0 0
        %797 = vmatprep.subr.bf16.mxu0 0
        %798 = vmatpush1.bf16.msra.mxu0 0
        %799 = vmatprep.subr.bf16.mxu0 0
        %800 = vmatpush1.bf16.msra.mxu0 0
        %801 = vmatprep.subr.bf16.mxu0 0
        %802 = vmatpush1.bf16.msra.mxu0 0
        %803 = vmatprep.subr.bf16.mxu0 %v371
        %804 = vmatpush1.bf16.msra.mxu0 %v368
        %805 = vmatprep.subr.bf16.mxu0 0
        %806 = vmatpush2.bf16.msra.mxu0 0
        %807 = vmatprep.subr.bf16.mxu0 0
        %808 = vmatpush2.bf16.msra.mxu0 0
        %809 = vmatprep.subr.bf16.mxu0 0
        %810 = vmatpush2.bf16.msra.mxu0 0
        %811 = vmatprep.subr.bf16.mxu0 0
        %812 = vmatpush2.bf16.msra.mxu0 0
        %813 = vmatprep.subr.bf16.mxu0 0
        %814 = vmatpush2.bf16.msra.mxu0 0
        %815 = vmatprep.subr.bf16.mxu0 0
        %816 = vmatpush2.bf16.msra.mxu0 0
        %817 = vmatprep.subr.bf16.mxu0 0
        %818 = vmatpush2.bf16.msra.mxu0 0
        %819 = vmatprep.subr.bf16.mxu0 0
        %820 = vmatpush2.bf16.msra.mxu0 0
        %821 = vmatprep.mubr.bf16.mxu0 0
        %822 = vmatmul.mubr.bf16.gmra.mxu0 %v301
        %v823 = vpop.f32.mrf.mxu0
        %v824 = vadd.f32 0.0, %v823
        %v825 = vpop.f32.mrf.mxu0
        %v826 = vadd.f32 0.0, %v825
        %v827 = vpop.f32.mrf.mxu0
        %v828 = vpop.f32.mrf.mxu0
        %829 = vdwg.mxu0
        %830 = vmatprep.subr.bf16.mxu0 0
        %831 = vmatpush1.bf16.msra.mxu0 0
        %832 = vmatprep.subr.bf16.mxu0 0
        %833 = vmatpush1.bf16.msra.mxu0 0
        %834 = vmatprep.subr.bf16.mxu0 0
        %835 = vmatpush1.bf16.msra.mxu0 0
        %836 = vmatprep.subr.bf16.mxu0 0
        %837 = vmatpush1.bf16.msra.mxu0 0
        %838 = vmatprep.subr.bf16.mxu0 0
        %839 = vmatpush1.bf16.msra.mxu0 0
        %840 = vmatprep.subr.bf16.mxu0 0
        %841 = vmatpush1.bf16.msra.mxu0 0
        %842 = vmatprep.subr.bf16.mxu0 0
        %843 = vmatpush1.bf16.msra.mxu0 0
        %844 = vmatprep.subr.bf16.mxu0 %v377
        %845 = vmatpush1.bf16.msra.mxu0 %v374
        %846 = vmatprep.subr.bf16.mxu0 0
        %847 = vmatpush2.bf16.msra.mxu0 0
        %848 = vmatprep.subr.bf16.mxu0 0
        %849 = vmatpush2.bf16.msra.mxu0 0
        %850 = vmatprep.subr.bf16.mxu0 0
        %851 = vmatpush2.bf16.msra.mxu0 0
        %852 = vmatprep.subr.bf16.mxu0 0
        %853 = vmatpush2.bf16.msra.mxu0 0
        %854 = vmatprep.subr.bf16.mxu0 0
        %855 = vmatpush2.bf16.msra.mxu0 0
        %856 = vmatprep.subr.bf16.mxu0 0
        %857 = vmatpush2.bf16.msra.mxu0 0
        %858 = vmatprep.subr.bf16.mxu0 0
        %859 = vmatpush2.bf16.msra.mxu0 0
        %860 = vmatprep.subr.bf16.mxu0 0
        %861 = vmatpush2.bf16.msra.mxu0 0
        %862 = vmatprep.mubr.bf16.mxu0 0
        %863 = vmatmul.mubr.bf16.gmra.mxu0 %v301
        %v864 = vpop.f32.mrf.mxu0
        %v865 = vadd.f32 0.0, %v864
        %v866 = vpop.f32.mrf.mxu0
        %v867 = vadd.f32 0.0, %v866
        %v868 = vpop.f32.mrf.mxu0
        %v869 = vpop.f32.mrf.mxu0
        %870 = vdwg.mxu0
        %v871 = vmul.f32 %v414, 0.003921569
        %v872 = vmul.f32 %v416, 0.003921569
        %v873 = vmul.f32 %v455, 0.003921569
        %v874 = vmul.f32 %v457, 0.003921569
        %v875 = vmul.f32 %v496, 0.003921569
        %v876 = vmul.f32 %v498, 0.003921569
        %v877 = vmul.f32 %v537, 0.003921569
        %v878 = vmul.f32 %v539, 0.003921569
        %v879 = vmul.f32 %v578, 0.003921569
        %v880 = vmul.f32 %v580, 0.003921569
        %v881 = vmul.f32 %v619, 0.003921569
        %v882 = vmul.f32 %v621, 0.003921569
        %v883 = vmul.f32 %v660, 0.003921569
        %v884 = vmul.f32 %v662, 0.003921569
        %v885 = vmul.f32 %v701, 0.003921569
        %v886 = vmul.f32 %v703, 0.003921569
        %v887 = vmul.f32 %v742, 0.003921569
        %v888 = vmul.f32 %v744, 0.003921569
        %v889 = vmul.f32 %v783, 0.003921569
        %v890 = vmul.f32 %v785, 0.003921569
        %v891 = vmul.f32 %v824, 0.003921569
        %v892 = vmul.f32 %v826, 0.003921569
        %v893 = vmul.f32 %v865, 0.003921569
        %v894 = vmul.f32 %v867, 0.003921569
        %v895 = vmax.f32 %v871, 0.0
        %v896 = vmax.f32 %v872, 0.0
        %v897 = vmax.f32 %v873, 0.0
        %v898 = vmax.f32 %v874, 0.0
        %v899 = vmax.f32 %v875, 0.0
        %v900 = vmax.f32 %v876, 0.0
        %v901 = vmax.f32 %v877, 0.0
        %v902 = vmax.f32 %v878, 0.0
        %v903 = vmax.f32 %v879, 0.0
        %v904 = vmax.f32 %v880, 0.0
        %v905 = vmax.f32 %v881, 0.0
        %v906 = vmax.f32 %v882, 0.0
        %v907 = vmax.f32 %v883, 0.0
        %v908 = vmax.f32 %v884, 0.0
        %v909 = vmax.f32 %v885, 0.0
        %v910 = vmax.f32 %v886, 0.0
        %v911 = vmax.f32 %v887, 0.0
        %v912 = vmax.f32 %v888, 0.0
        %v913 = vmax.f32 %v889, 0.0
        %v914 = vmax.f32 %v890, 0.0
        %v915 = vmax.f32 %v891, 0.0
        %v916 = vmax.f32 %v892, 0.0
        %v917 = vmax.f32 %v893, 0.0
        %v918 = vmax.f32 %v894, 0.0
        %v919 = vmin.f32 %v895, 1.0
        %v920 = vmin.f32 %v896, 1.0
        %v921 = vmin.f32 %v897, 1.0
        %v922 = vmin.f32 %v898, 1.0
        %v923 = vmin.f32 %v899, 1.0
        %v924 = vmin.f32 %v900, 1.0
        %v925 = vmin.f32 %v901, 1.0
        %v926 = vmin.f32 %v902, 1.0
        %v927 = vmin.f32 %v903, 1.0
        %v928 = vmin.f32 %v904, 1.0
        %v929 = vmin.f32 %v905, 1.0
        %v930 = vmin.f32 %v906, 1.0
        %v931 = vmin.f32 %v907, 1.0
        %v932 = vmin.f32 %v908, 1.0
        %v933 = vmin.f32 %v909, 1.0
        %v934 = vmin.f32 %v910, 1.0
        %v935 = vmin.f32 %v911, 1.0
        %v936 = vmin.f32 %v912, 1.0
        %v937 = vmin.f32 %v913, 1.0
        %v938 = vmin.f32 %v914, 1.0
        %v939 = vmin.f32 %v915, 1.0
        %v940 = vmin.f32 %v916, 1.0
        %v941 = vmin.f32 %v917, 1.0
        %v942 = vmin.f32 %v918, 1.0
        %v967 = vcombine.low %v919, %v920
        %v968 = vcombine.low %v921, %v922
        %v970 = vunpack.c.l.s4 1983009808
        %v971 = vunpack.c.0.s8 %v970
        %v972 = vlaneseq
        %v973 = vshrl.u32 %v972, 7
        %v974 = vsub.s32 %v971, %v973
        %v975 = vrot.slane %v967, %v974
        %v977 = vunpack.c.l.s4 1983009808
        %v978 = vunpack.c.0.s8 %v977
        %v979 = vlaneseq
        %v980 = vshrl.u32 %v979, 7
        %v981 = vsub.s32 %v978, %v980
        %v982 = vrot.slane %v968, %v981
        %v983 = vcombine.low %v975, %v982
        %v984 = vcombine.low %v923, %v924
        %v985 = vcombine.low %v925, %v926
        %v987 = vunpack.c.l.s4 1983009808
        %v988 = vunpack.c.0.s8 %v987
        %v989 = vlaneseq
        %v990 = vshrl.u32 %v989, 7
        %v991 = vsub.s32 %v988, %v990
        %v992 = vrot.slane %v984, %v991
        %v994 = vunpack.c.l.s4 1983009808
        %v995 = vunpack.c.0.s8 %v994
        %v996 = vlaneseq
        %v997 = vshrl.u32 %v996, 7
        %v998 = vsub.s32 %v995, %v997
        %v999 = vrot.slane %v985, %v998
        %v1000 = vcombine.low %v992, %v999
        %v1001 = vcombine.low %v927, %v928
        %v1002 = vcombine.low %v929, %v930
        %v1004 = vunpack.c.l.s4 1983009808
        %v1005 = vunpack.c.0.s8 %v1004
        %v1006 = vlaneseq
        %v1007 = vshrl.u32 %v1006, 7
        %v1008 = vsub.s32 %v1005, %v1007
        %v1009 = vrot.slane %v1001, %v1008
        %v1011 = vunpack.c.l.s4 1983009808
        %v1012 = vunpack.c.0.s8 %v1011
        %v1013 = vlaneseq
        %v1014 = vshrl.u32 %v1013, 7
        %v1015 = vsub.s32 %v1012, %v1014
        %v1016 = vrot.slane %v1002, %v1015
        %v1017 = vcombine.low %v1009, %v1016
        %v1018 = vcombine.low %v931, %v932
        %v1019 = vcombine.low %v933, %v934
        %v1021 = vunpack.c.l.s4 1983009808
        %v1022 = vunpack.c.0.s8 %v1021
        %v1023 = vlaneseq
        %v1024 = vshrl.u32 %v1023, 7
        %v1025 = vsub.s32 %v1022, %v1024
        %v1026 = vrot.slane %v1018, %v1025
        %v1028 = vunpack.c.l.s4 1983009808
        %v1029 = vunpack.c.0.s8 %v1028
        %v1030 = vlaneseq
        %v1031 = vshrl.u32 %v1030, 7
        %v1032 = vsub.s32 %v1029, %v1031
        %v1033 = vrot.slane %v1019, %v1032
        %v1034 = vcombine.low %v1026, %v1033
        %v1035 = vcombine.low %v935, %v936
        %v1036 = vcombine.low %v937, %v938
        %v1038 = vunpack.c.l.s4 1983009808
        %v1039 = vunpack.c.0.s8 %v1038
        %v1040 = vlaneseq
        %v1041 = vshrl.u32 %v1040, 7
        %v1042 = vsub.s32 %v1039, %v1041
        %v1043 = vrot.slane %v1035, %v1042
        %v1045 = vunpack.c.l.s4 1983009808
        %v1046 = vunpack.c.0.s8 %v1045
        %v1047 = vlaneseq
        %v1048 = vshrl.u32 %v1047, 7
        %v1049 = vsub.s32 %v1046, %v1048
        %v1050 = vrot.slane %v1036, %v1049
        %v1051 = vcombine.low %v1043, %v1050
        %v1052 = vcombine.low %v939, %v940
        %v1053 = vcombine.low %v941, %v942
        %v1055 = vunpack.c.l.s4 1983009808
        %v1056 = vunpack.c.0.s8 %v1055
        %v1057 = vlaneseq
        %v1058 = vshrl.u32 %v1057, 7
        %v1059 = vsub.s32 %v1056, %v1058
        %v1060 = vrot.slane %v1052, %v1059
        %v1062 = vunpack.c.l.s4 1983009808
        %v1063 = vunpack.c.0.s8 %v1062
        %v1064 = vlaneseq
        %v1065 = vshrl.u32 %v1064, 7
        %v1066 = vsub.s32 %v1063, %v1065
        %v1067 = vrot.slane %v1053, %v1066
        %v1068 = vcombine.low %v1060, %v1067
        %1075 = vst [vmem:[%s174] sm:$0xff] %v983
        %1076 = vst [vmem:[%s174 + $0x8] sm:$0xff] %v1000
        %1077 = vst [vmem:[%s174 + $0x10] sm:$0xff] %v1017
        %1078 = vst [vmem:[%s174 + $0x18] sm:$0xff] %v1034
        %1079 = vst [vmem:[%s174 + $0x20] sm:$0xff] %v1051
        %1080 = vst [vmem:[%s174 + $0x28] sm:$0xff] %v1068
        %s1081 = sand.u32 %s75, 1
        %s1082 = scalar_lea.sflag [#allocation4], %s1081
        %s1083 = sand.u32 %s75, 1
        %s1084 = smul.addr %s1083, 48
        %s1085 = scalar_lea.vmem [#allocation7], %s1084
        // Predicated region
        $region37: #{tpu_custom_call.1} parent=27 // pred_check
          %p1086 = pneg %p85
        $region38: #{tpu_custom_call.1} parent=27 // pred_check_branch
          %1088 = sbr.rel (%p1086) target = $region40
        $region39: #{tpu_custom_call.1} parent=27 // pred_region
          %s1089 = smul.u32 24, %s20
          %s1091 = ssub.s32 768, 768
          %1092 = vsyncadd %s1082, %s1091
          %s1093 = smul.addr %s1089, 32
          %s1094 = scalar_lea.hbm %s2, %s1093
          %s1096 = sshll.u32 %s1085, 4
          %s1097 = int_to_ptr.vmem [resolvable:$true] %s1096
          %1099 = dma.vmem_to_hbm [thread:$0]  %s1097, 768, %s1094, %s1082
        $region40: #{tpu_custom_call.1} parent=27 // pred_fallthru
          _
      $region28: #{tpu_custom_call.1} parent=5 // pred_fallthru
        _
      %p1100 = scmp.le.s32.totalorder 2, %s15
      // Predicated region
      $region41: #{tpu_custom_call.1} parent=5 // pred_check
        %p1101 = pneg %p1100
      $region42: #{tpu_custom_call.1} parent=5 // pred_check_branch
        %1103 = sbr.rel (%p1101) target = $region44
      $region43: #{tpu_custom_call.1} parent=5 // pred_region
        %s1104 = ssub.s32 %s15, 2
        // Predicated region
        $region45: #{tpu_custom_call.1} parent=43 // pred_check
          %p1105 = pneg %p91
        $region46: #{tpu_custom_call.1} parent=43 // pred_check_branch
          %1107 = sbr.rel (%p1105) target = $region48
        $region47: #{tpu_custom_call.1} parent=43 // pred_region
          %s1108 = sand.u32 %s76, 1
          %s1109 = scalar_lea.sflag [#allocation4], %s1108
          %s1110 = sand.u32 %s76, 1
          %s1111 = smul.addr %s1110, 48
          %s1112 = scalar_lea.vmem [#allocation7], %s1111
          %1113 = dma.done %s1109, 768
        $region48: #{tpu_custom_call.1} parent=43 // pred_fallthru
          _
      $region44: #{tpu_custom_call.1} parent=5 // pred_fallthru
        _
    $region6: #{tpu_custom_call.1} parent=1 // loop_footer
      %s19 = sadd.s32 1, %s15
    $region7: #{tpu_custom_call.1} parent=1 // loop_footer_branch
      %14 = sbr.rel target = $region3
    $region8: #{tpu_custom_call.1} parent=1 // loop_exit
      _
    %1114 = vsyncpa [#allocation3], 1
    %s1115 = scalar_lea.sflag [#allocation3], 1
    %1116 = vsyncpa %s1115, 1
    %1117 = vsyncpa [#allocation6], 1
    %s1118 = scalar_lea.sflag [#allocation6], 1
    %1119 = vsyncpa %s1118, 1
    %1120 = vsyncpa [#allocation4], 1
    %s1121 = scalar_lea.sflag [#allocation4], 1
    %1122 = vsyncpa %s1121, 1

</llo_original>
